<compile_context>
chip_gen: v7x
topology: tpu7x:2x2x1
jax: 0.10.0
libtpu: 0.0.40
codegen_flags: <defaults>
</compile_context>

<pallas_src>
import math

import jax
import jax.numpy as jnp
from jax.experimental import pallas as pl
from jax.experimental.pallas import tpu as pltpu

INPUT_DIM = 42          # UNSW-style tabular feature dimension
HIDDEN = [16, 8]        # 42 -> 16 -> 8 -> 1
OUT_DIM = 1
NUM_LAYERS = 3
LEAKY = 0.2

PAD = 128               # feature dims zero-padded to one full lane tile (in VMEM)
BLOCK_B = 128           # batch rows per grid step (sublane-dense tile)
BATCH = 256             # example batch (2 grid steps -> exercises the grid)


def _leaky_relu(x):
    return jnp.where(x > 0, x, LEAKY * x)


def discriminator_kernel(x_ref, w_ref, b_ref, out_ref, xpad_ref):
    """Whole 3-layer MLP on one (BLOCK_B, in_dim) input tile.

    x_ref   : (BLOCK_B, in_dim) f32   raw (unpadded) input rows
    w_ref   : (3, 128, 128)     bf16  packed weights (one resident DMA)
    b_ref   : (8, 128)          f32   packed biases  (one resident DMA)
    out_ref : (1, 8, BLOCK_B)   f32   lane-dense logits; row 0 is the answer
    xpad_ref: (BLOCK_B, 128)    f32   VMEM scratch for lane-padding the input
    """
    in_dim = x_ref.shape[1]

    # Lane-pad the raw input tile to 128 inside VMEM.  Zero padding is exact:
    # padded lanes stay 0 through every Linear(+0 bias) and LeakyReLU.
    # (Re-zeroed every step so correctness never depends on grid scheduling.)
    xpad_ref[...] = jnp.zeros_like(xpad_ref)
    xpad_ref[:, :in_dim] = x_ref[...]

    b = b_ref[...]                        # (8, 128) f32, loaded once
    h = xpad_ref[...]                     # (BLOCK_B, 128) f32

    # Linear(42,16)+LeakyReLU, Linear(16,8)+LeakyReLU  (bf16 MXU, f32 acc)
    for i in range(NUM_LAYERS - 1):
        h = jnp.dot(h.astype(jnp.bfloat16), w_ref[i],
                    preferred_element_type=jnp.float32) + b[i:i + 1, :]
        h = _leaky_relu(h)

    # Last Linear(8,1): move batch into lanes (one square XLU transpose) so
    # the logits come out as a single lane-dense (8, BLOCK_B) block instead of
    # a (BLOCK_B, 128) slab with 127 dead columns.
    ht = jnp.transpose(h).astype(jnp.bfloat16)           # (128 feat, BLOCK_B)
    w3_t = w_ref[NUM_LAYERS - 1][:8, :]                  # (8, 128); row 0 = W3^T
    logits = jnp.dot(w3_t, ht, preferred_element_type=jnp.float32)  # (8, BLOCK_B)
    out_ref[0] = logits + b[NUM_LAYERS - 1:NUM_LAYERS, :]  # row 0 holds the logit


@jax.jit
def discriminator_forward(x, w_slab, b_slab):
    """x: (B, INPUT_DIM) f32 -> validity logits (B, 1) f32."""
    batch, in_dim = x.shape
    assert in_dim <= PAD

    pad_b = (-batch) % BLOCK_B                       # batch-pad only if needed
    x_p = jnp.pad(x.astype(jnp.float32), ((0, pad_b), (0, 0)))
    n_tiles = x_p.shape[0] // BLOCK_B

    out = pl.pallas_call(
        discriminator_kernel,
        out_shape=jax.ShapeDtypeStruct((n_tiles, 8, BLOCK_B), jnp.float32),
        grid=(n_tiles,),
        in_specs=[
            pl.BlockSpec((BLOCK_B, in_dim), lambda i: (i, 0)),            # x tile
            pl.BlockSpec((NUM_LAYERS, PAD, PAD), lambda i: (0, 0, 0)),    # weights
            pl.BlockSpec((8, PAD), lambda i: (0, 0)),                     # biases
        ],
        out_specs=pl.BlockSpec((1, 8, BLOCK_B), lambda i: (i, 0, 0)),
        scratch_shapes=[pltpu.VMEM((BLOCK_B, PAD), jnp.float32)],
        compiler_params=pltpu.CompilerParams(
            dimension_semantics=("parallel",)),
    )(x_p, w_slab, b_slab)

    logits = out[:, 0, :].reshape(-1)[:batch]        # drop batch padding
    return logits[:, None]


def init_params(key, input_dim=INPUT_DIM):
    """PyTorch-default Linear init (U(-1/sqrt(fan_in), +1/sqrt(fan_in)))."""
    dims = [input_dim] + HIDDEN + [OUT_DIM]
    params = []
    for fin, fout in zip(dims[:-1], dims[1:]):
        key, kw, kb = jax.random.split(key, 3)
        bound = 1.0 / math.sqrt(fin)
        w = jax.random.uniform(kw, (fin, fout), jnp.float32, -bound, bound)
        bias = jax.random.uniform(kb, (fout,), jnp.float32, -bound, bound)
        params.append((w, bias))
    return params


def pack_params(params):
    """Pack raw per-layer (W, b) into the two padded slabs the kernel consumes."""
    w_slab = jnp.zeros((NUM_LAYERS, PAD, PAD), jnp.float32)
    b_slab = jnp.zeros((8, PAD), jnp.float32)
    # Layers 0, 1: standard (fin, fout) zero-padded.
    for i in range(NUM_LAYERS - 1):
        w, bias = params[i]
        w_slab = w_slab.at[i, :w.shape[0], :w.shape[1]].set(w)
        b_slab = b_slab.at[i, :bias.shape[0]].set(bias)
    # Layer 2: W3^T in row 0 (lanes 0..7); scalar bias broadcast across lanes.
    w3, b3 = params[NUM_LAYERS - 1]
    w_slab = w_slab.at[NUM_LAYERS - 1, 0, :w3.shape[0]].set(w3[:, 0])
    b_slab = b_slab.at[NUM_LAYERS - 1, :].set(b3[0])
    return w_slab.astype(jnp.bfloat16), b_slab


def discriminator_reference(x, params):
    """Pure-JAX reference mirroring the kernel math (bf16 matmul, f32 acc)."""
    h = x.astype(jnp.float32)
    for i, (w, bias) in enumerate(params):
        h = jnp.dot(h.astype(jnp.bfloat16), w.astype(jnp.bfloat16),
                    preferred_element_type=jnp.float32) + bias
        if i < len(params) - 1:
            h = _leaky_relu(h)
    return h


if __name__ == "__main__":
    key = jax.random.PRNGKey(0)
    key, kx = jax.random.split(key)
    x = jax.random.normal(kx, (BATCH, INPUT_DIM), jnp.float32)

    params = init_params(key)
    w_slab, b_slab = pack_params(params)

    out = jax.block_until_ready(discriminator_forward(x, w_slab, b_slab))

    ref = discriminator_reference(x, params)
    assert out.shape == (BATCH, OUT_DIM)
    assert jnp.allclose(out, ref, atol=1e-2, rtol=1e-2), "mismatch vs reference"

    print("KERNEL_OK")
</pallas_src>

<mosaic_0001>
module attributes {stable_mosaic.version = 11 : i64} {
  func.func @discriminator_kernel(%arg0: i32, %arg1: memref<128x42xf32, #tpu.memory_space<vmem>>, %arg2: memref<3x128x128xbf16, #tpu.memory_space<vmem>>, %arg3: memref<8x128xf32, #tpu.memory_space<vmem>>, %arg4: memref<1x8x128xf32, #tpu.memory_space<vmem>>, %arg5: memref<128x128xf32, #tpu.memory_space<vmem>>) attributes {dimension_semantics = [#tpu.dimension_semantics<parallel>], iteration_bounds = array<i64: 2>, scalar_prefetch = 0 : i64, scratch_operands = 1 : i64, tpu.core_type = #tpu.core_type<tc>, window_params = [{transform_indices = @transform_0, window_bounds = array<i64: 128, 42>}, {pipeline_mode = #tpu.pipeline_mode<synchronous>, transform_indices = @transform_1, window_bounds = array<i64: 3, 128, 128>}, {pipeline_mode = #tpu.pipeline_mode<synchronous>, transform_indices = @transform_2, window_bounds = array<i64: 8, 128>}, {transform_indices = @transform_3, window_bounds = array<i64: 1, 8, 128>}]} {
    %cst = arith.constant 0.000000e+00 : f32
    %0 = vector.broadcast %cst : f32 to vector<128x128xf32>
    %c0 = arith.constant 0 : index
    %c0_0 = arith.constant 0 : index
    %1 = vector.load %arg5[%c0, %c0_0] : memref<128x128xf32, #tpu.memory_space<vmem>>, vector<128x128xf32>
    tpu.vector_store %arg5[%c0, %c0_0], %0 {strides = array<i32>} : memref<128x128xf32, #tpu.memory_space<vmem>>, vector<128x128xf32>,
    %c0_1 = arith.constant 0 : index
    %c0_2 = arith.constant 0 : index
    %2 = vector.load %arg1[%c0_1, %c0_2] : memref<128x42xf32, #tpu.memory_space<vmem>>, vector<128x42xf32>
    %c0_3 = arith.constant 0 : index
    %c0_4 = arith.constant 0 : index
    %3 = vector.load %arg5[%c0_3, %c0_4] : memref<128x128xf32, #tpu.memory_space<vmem>>, vector<128x42xf32>
    tpu.vector_store %arg5[%c0_3, %c0_4], %2 {strides = array<i32>} : memref<128x128xf32, #tpu.memory_space<vmem>>, vector<128x42xf32>,
    %c0_5 = arith.constant 0 : index
    %c0_6 = arith.constant 0 : index
    %4 = vector.load %arg3[%c0_5, %c0_6] : memref<8x128xf32, #tpu.memory_space<vmem>>, vector<8x128xf32>
    %c0_7 = arith.constant 0 : index
    %c0_8 = arith.constant 0 : index
    %5 = vector.load %arg5[%c0_7, %c0_8] : memref<128x128xf32, #tpu.memory_space<vmem>>, vector<128x128xf32>
    %6 = arith.truncf %5 : vector<128x128xf32> to vector<128x128xbf16>
    %c0_9 = arith.constant 0 : index
    %c0_10 = arith.constant 0 : index
    %c0_11 = arith.constant 0 : index
    %7 = vector.load %arg2[%c0_9, %c0_10, %c0_11] : memref<3x128x128xbf16, #tpu.memory_space<vmem>>, vector<1x128x128xbf16>
    %8 = vector.shape_cast %7 : vector<1x128x128xbf16> to vector<128x128xbf16>
    %cst_12 = arith.constant dense<0.000000e+00> : vector<128x128xf32>
    %9 = tpu.matmul %6, %8, %cst_12 {dimension_numbers = #tpu.dot_dimension_numbers<[1], [0], [0], [1], [0, 0, 1, 1], [], []>} : vector<128x128xbf16>, vector<128x128xbf16>, vector<128x128xf32> -> vector<128x128xf32>
    %10 = vector.extract_strided_slice %4 {offsets = [0, 0], sizes = [1, 128], strides = [1, 1]} : vector<8x128xf32> to vector<1x128xf32>
    %11 = vector.broadcast %10 : vector<1x128xf32> to vector<128x128xf32>
    %12 = arith.addf %9, %11 : vector<128x128xf32>
    %cst_13 = arith.constant 0.000000e+00 : f32
    %13 = vector.broadcast %cst_13 : f32 to vector<128x128xf32>
    %14 = arith.cmpf ogt, %12, %13 : vector<128x128xf32>
    %cst_14 = arith.constant 2.000000e-01 : f32
    %15 = vector.broadcast %cst_14 : f32 to vector<128x128xf32>
    %16 = arith.mulf %15, %12 : vector<128x128xf32>
    %17 = arith.select %14, %12, %16 : vector<128x128xi1>, vector<128x128xf32>
    %18 = arith.truncf %17 : vector<128x128xf32> to vector<128x128xbf16>
    %c1 = arith.constant 1 : index
    %c0_15 = arith.constant 0 : index
    %c0_16 = arith.constant 0 : index
    %19 = vector.load %arg2[%c1, %c0_15, %c0_16] : memref<3x128x128xbf16, #tpu.memory_space<vmem>>, vector<1x128x128xbf16>
    %20 = vector.shape_cast %19 : vector<1x128x128xbf16> to vector<128x128xbf16>
    %cst_17 = arith.constant dense<0.000000e+00> : vector<128x128xf32>
    %21 = tpu.matmul %18, %20, %cst_17 {dimension_numbers = #tpu.dot_dimension_numbers<[1], [0], [0], [1], [0, 0, 1, 1], [], []>} : vector<128x128xbf16>, vector<128x128xbf16>, vector<128x128xf32> -> vector<128x128xf32>
    %22 = vector.extract_strided_slice %4 {offsets = [1, 0], sizes = [1, 128], strides = [1, 1]} : vector<8x128xf32> to vector<1x128xf32>
    %23 = vector.broadcast %22 : vector<1x128xf32> to vector<128x128xf32>
    %24 = arith.addf %21, %23 : vector<128x128xf32>
    %cst_18 = arith.constant 0.000000e+00 : f32
    %25 = vector.broadcast %cst_18 : f32 to vector<128x128xf32>
    %26 = arith.cmpf ogt, %24, %25 : vector<128x128xf32>
    %cst_19 = arith.constant 2.000000e-01 : f32
    %27 = vector.broadcast %cst_19 : f32 to vector<128x128xf32>
    %28 = arith.mulf %27, %24 : vector<128x128xf32>
    %29 = arith.select %26, %24, %28 : vector<128x128xi1>, vector<128x128xf32>
    %30 = tpu.transpose %29, [1, 0] : vector<128x128xf32> -> vector<128x128xf32>
    %31 = arith.truncf %30 : vector<128x128xf32> to vector<128x128xbf16>
    %c2 = arith.constant 2 : index
    %c0_20 = arith.constant 0 : index
    %c0_21 = arith.constant 0 : index
    %32 = vector.load %arg2[%c2, %c0_20, %c0_21] : memref<3x128x128xbf16, #tpu.memory_space<vmem>>, vector<1x128x128xbf16>
    %33 = vector.shape_cast %32 : vector<1x128x128xbf16> to vector<128x128xbf16>
    %34 = vector.extract_strided_slice %33 {offsets = [0, 0], sizes = [8, 128], strides = [1, 1]} : vector<128x128xbf16> to vector<8x128xbf16>
    %cst_22 = arith.constant dense<0.000000e+00> : vector<8x128xf32>
    %35 = tpu.matmul %34, %31, %cst_22 {dimension_numbers = #tpu.dot_dimension_numbers<[1], [0], [0], [1], [0, 0, 1, 1], [], []>} : vector<8x128xbf16>, vector<128x128xbf16>, vector<8x128xf32> -> vector<8x128xf32>
    %36 = vector.extract_strided_slice %4 {offsets = [2, 0], sizes = [1, 128], strides = [1, 1]} : vector<8x128xf32> to vector<1x128xf32>
    %37 = vector.broadcast %36 : vector<1x128xf32> to vector<8x128xf32>
    %38 = arith.addf %35, %37 : vector<8x128xf32>
    %c0_23 = arith.constant 0 : index
    %c0_24 = arith.constant 0 : index
    %c0_25 = arith.constant 0 : index
    %39 = vector.load %arg4[%c0_23, %c0_24, %c0_25] : memref<1x8x128xf32, #tpu.memory_space<vmem>>, vector<1x8x128xf32>
    %40 = vector.shape_cast %39 : vector<1x8x128xf32> to vector<8x128xf32>
    %41 = vector.shape_cast %38 : vector<8x128xf32> to vector<1x8x128xf32>
    tpu.vector_store %arg4[%c0_23, %c0_24, %c0_25], %41 {strides = array<i32>} : memref<1x8x128xf32, #tpu.memory_space<vmem>>, vector<1x8x128xf32>,
    return
  }
  func.func @transform_0(%arg0: i32) -> (i32, i32) {
    %c0_i32 = arith.constant 0 : i32
    %c0_i32_0 = arith.constant 0 : i32
    return %arg0, %c0_i32 : i32, i32
  }
  func.func @transform_1(%arg0: i32) -> (i32, i32, i32) {
    %c0_i32 = arith.constant 0 : i32
    %c0_i32_0 = arith.constant 0 : i32
    %c0_i32_1 = arith.constant 0 : i32
    %c0_i32_2 = arith.constant 0 : i32
    return %c0_i32, %c0_i32_0, %c0_i32_1 : i32, i32, i32
  }
  func.func @transform_2(%arg0: i32) -> (i32, i32) {
    %c0_i32 = arith.constant 0 : i32
    %c0_i32_0 = arith.constant 0 : i32
    %c0_i32_1 = arith.constant 0 : i32
    return %c0_i32, %c0_i32_0 : i32, i32
  }
  func.func @transform_3(%arg0: i32) -> (i32, i32, i32) {
    %c0_i32 = arith.constant 0 : i32
    %c0_i32_0 = arith.constant 0 : i32
    %c0_i32_1 = arith.constant 0 : i32
    return %arg0, %c0_i32, %c0_i32_0 : i32, i32, i32
  }
}

</mosaic_0001>

<llo_original>
// kernel: discriminator_forward.1
$region0: #{discriminator_forward.1}
  #allocation0 [shape = 'u32[]', space=smem, size = 0x4, offset = 0x4, fixed_abs, tag = 'smem constant byte address 0x4 - core index']
  #allocation1 [shape = 'u32[144,128]{1,0:T(1,128)}', space=vmem, size = 0x12000, scoped, tag = 'internal scratch']
  #allocation2 [shape = 'f32[128,128]{1,0:T(8,128)}', space=vmem, size = 0x10000, scoped, tag = 'scratch operand']
  %s0 = inlined_call_operand.vmem [shape: f32[256,42], index: 0, kind: input, shape index: {}]
  %s1 = inlined_call_operand.vmem [shape: bf16[3,128,128], index: 1, kind: input, shape index: {}]
  %s2 = inlined_call_operand.vmem [shape: f32[8,128], index: 2, kind: input, shape index: {}]
  %s3 = inlined_call_operand.vmem [shape: f32[2,8,128], index: 3, kind: output, shape index: {}]
  %s4 = sld [smem:[#allocation0]]
  $region45: #{discriminator_forward.1} parent=0
    _
  %s6 = ssub.s32 1, %s4
  %s7 = scalar_select 0, %s6, %s4
  loop: start=0, step=1, limit=4
  $region2: #{discriminator_forward.1} parent=0 // loop_pre_header
    _
  $region3: #{discriminator_forward.1} parent=0 // loop_header
    %s9 = sphi 0, %s13
    %p10 = scmp.ge.s32.totalorder %s9, 4
    %s19 = sphi 0, %s21
    %s22 = sphi 0, %s19
    %s23 = sphi 0, %s22
    %s39 = sphi 0, %s23
    %s43 = sphi 0, %s43
    %s45 = sphi 0, %s43
    %s46 = sphi 0, %s45
    %s60 = sphi 0, %s46
    %s64 = sphi 0, %s64
    %s66 = sphi 0, %s64
    %s67 = sphi 0, %s66
    %s81 = sphi 0, %s67
    %s87 = sphi 0, %s89
    %s90 = sphi 0, %s87
    %s91 = sphi 0, %s90
    %s107 = sphi 0, %s91
  $region4: #{discriminator_forward.1} parent=0 // loop_header_branch
    %12 = sbr.rel (%p10) target = $region8
  $region5: #{discriminator_forward.1} parent=0 // loop_body
    %s14 = ssub.s32 %s9, 1
    %s15 = ssub.s32 %s9, 2
    %s16 = sadd.s32 %s9, 1
    %s17 = ssub.s32 %s9, %s16
    %p18 = scmp.eq.s32.totalorder %s17, 0
    %s20 = sadd.s32 %s19, 1
    %s21 = scalar_select %p18, %s19, %s20
    %p24 = pneg %p18
    %p25 = scmp.eq.s32.totalorder %s9, 1
    %p26 = por %p24, %p25
    %p27 = scmp.ne.s32.totalorder %s19, %s22
    %p28 = scmp.eq.s32.totalorder %s9, 0
    %p29 = por %p27, %p28
    %p30 = scmp.ne.s32.totalorder %s19, %s22
    %p31 = scmp.eq.s32.totalorder %s14, 1
    %p32 = por %p30, %p31
    %p33 = scmp.ne.s32.totalorder %s22, %s23
    %p34 = scmp.eq.s32.totalorder %s14, 0
    %p35 = por %p33, %p34
    %p36 = scmp.ne.s32.totalorder %s22, %s23
    %p37 = scmp.eq.s32.totalorder %s15, 1
    %p38 = por %p36, %p37
    %p40 = scmp.ne.s32.totalorder %s23, %s39
    %p41 = scmp.eq.s32.totalorder %s15, 0
    %p42 = por %p40, %p41
    %s44 = sadd.s32 %s43, 1
    %p47 = scmp.eq.s32.totalorder %s9, 1
    %p48 = scmp.ne.s32.totalorder %s43, %s45
    %p49 = scmp.eq.s32.totalorder %s9, 0
    %p50 = por %p48, %p49
    %p51 = scmp.ne.s32.totalorder %s43, %s45
    %p52 = scmp.eq.s32.totalorder %s14, 1
    %p53 = por %p51, %p52
    %p54 = scmp.ne.s32.totalorder %s45, %s46
    %p55 = scmp.eq.s32.totalorder %s14, 0
    %p56 = por %p54, %p55
    %p57 = scmp.ne.s32.totalorder %s45, %s46
    %p58 = scmp.eq.s32.totalorder %s15, 1
    %p59 = por %p57, %p58
    %p61 = scmp.ne.s32.totalorder %s46, %s60
    %p62 = scmp.eq.s32.totalorder %s15, 0
    %p63 = por %p61, %p62
    %s65 = sadd.s32 %s64, 1
    %p68 = scmp.eq.s32.totalorder %s9, 1
    %p69 = scmp.ne.s32.totalorder %s64, %s66
    %p70 = scmp.eq.s32.totalorder %s9, 0
    %p71 = por %p69, %p70
    %p72 = scmp.ne.s32.totalorder %s64, %s66
    %p73 = scmp.eq.s32.totalorder %s14, 1
    %p74 = por %p72, %p73
    %p75 = scmp.ne.s32.totalorder %s66, %s67
    %p76 = scmp.eq.s32.totalorder %s14, 0
    %p77 = por %p75, %p76
    %p78 = scmp.ne.s32.totalorder %s66, %s67
    %p79 = scmp.eq.s32.totalorder %s15, 1
    %p80 = por %p78, %p79
    %p82 = scmp.ne.s32.totalorder %s67, %s81
    %p83 = scmp.eq.s32.totalorder %s15, 0
    %p84 = por %p82, %p83
    %s85 = ssub.s32 %s9, %s16
    %p86 = scmp.eq.s32.totalorder %s85, 0
    %s88 = sadd.s32 %s87, 1
    %s89 = scalar_select %p86, %s87, %s88
    %p92 = pneg %p86
    %p93 = scmp.eq.s32.totalorder %s9, 1
    %p94 = por %p92, %p93
    %p95 = scmp.ne.s32.totalorder %s87, %s90
    %p96 = scmp.eq.s32.totalorder %s9, 0
    %p97 = por %p95, %p96
    %p98 = scmp.ne.s32.totalorder %s87, %s90
    %p99 = scmp.eq.s32.totalorder %s14, 1
    %p100 = por %p98, %p99
    %p101 = scmp.ne.s32.totalorder %s90, %s91
    %p102 = scmp.eq.s32.totalorder %s14, 0
    %p103 = por %p101, %p102
    %p104 = scmp.ne.s32.totalorder %s90, %s91
    %p105 = scmp.eq.s32.totalorder %s15, 1
    %p106 = por %p104, %p105
    %p108 = scmp.ne.s32.totalorder %s91, %s107
    %p109 = scmp.eq.s32.totalorder %s15, 0
    %p110 = por %p108, %p109
    %p111 = scmp.le.s32.totalorder 1, %s9
    %p112 = scmp.lt.s32.totalorder %s9, 3
    %p113 = pnand %p111, %p112
    %p114 = pneg %p113
    // Predicated region
    $region9: #{discriminator_forward.1} parent=5 // pred_check
      _
    $region10: #{discriminator_forward.1} parent=5 // pred_check_branch
      %116 = sbr.rel (%p113) target = $region12
    $region11: #{discriminator_forward.1} parent=5 // pred_region
      %s117 = ssub.s32 %s9, 1
      // Predicated region
      $region13: #{discriminator_forward.1} parent=11 // pred_check
        %p118 = pneg %p56
      $region14: #{discriminator_forward.1} parent=11 // pred_check_branch
        %120 = sbr.rel (%p118) target = $region16
      $region15: #{discriminator_forward.1} parent=11 // pred_region
        _
      $region16: #{discriminator_forward.1} parent=11 // pred_fallthru
        _
      // Predicated region
      $region17: #{discriminator_forward.1} parent=11 // pred_check
        %p121 = pneg %p77
      $region18: #{discriminator_forward.1} parent=11 // pred_check_branch
        %123 = sbr.rel (%p121) target = $region20
      $region19: #{discriminator_forward.1} parent=11 // pred_region
        _
      $region20: #{discriminator_forward.1} parent=11 // pred_fallthru
        _
    $region12: #{discriminator_forward.1} parent=5 // pred_fallthru
      _
    %p124 = scmp.lt.s32.totalorder %s9, 2
    // Predicated region
    $region21: #{discriminator_forward.1} parent=5 // pred_check
      %p125 = pneg %p124
    $region22: #{discriminator_forward.1} parent=5 // pred_check_branch
      %127 = sbr.rel (%p125) target = $region24
    $region23: #{discriminator_forward.1} parent=5 // pred_region
      // Predicated region
      $region25: #{discriminator_forward.1} parent=23 // pred_check
        %p128 = pneg %p29
      $region26: #{discriminator_forward.1} parent=23 // pred_check_branch
        %130 = sbr.rel (%p128) target = $region28
      $region27: #{discriminator_forward.1} parent=23 // pred_region
        %s131 = smul.u32 16, %s9
        %p132 = scmp.lt.s32.totalorder %s131, 31
        %s133 = scalar_select %p132, %s131, 31
        %s134 = smul.addr %s133, 8
        %s135 = scalar_lea.vmem %s0, %s134
        %s136 = smul.u32 16, %s9
      $region28: #{discriminator_forward.1} parent=23 // pred_fallthru
        _
    $region24: #{discriminator_forward.1} parent=5 // pred_fallthru
      _
    %p137 = scmp.le.s32.totalorder 1, %s9
    %p138 = scmp.lt.s32.totalorder %s9, 3
    %p139 = pnand %p137, %p138
    %p140 = pneg %p139
    // Predicated region
    $region29: #{discriminator_forward.1} parent=5 // pred_check
      _
    $region30: #{discriminator_forward.1} parent=5 // pred_check_branch
      %142 = sbr.rel (%p139) target = $region32
    $region31: #{discriminator_forward.1} parent=5 // pred_region
      %s143 = ssub.s32 %s9, 1
      %s144 = smul.u32 16, %s14
      %p145 = scmp.lt.s32.totalorder %s144, 31
      %s146 = scalar_select %p145, %s144, 31
      %s147 = smul.addr %s146, 8
      %s148 = scalar_lea.vmem %s0, %s147
      %p149 = pneg %p35
      %p150 = pneg %p32
      %p151 = pneg %p56
      %p152 = pneg %p53
      %p153 = pneg %p77
      %p154 = pneg %p74
      %p155 = pneg %p103
      %p156 = pneg %p100
      %p157 = scmp.lt.s32.totalorder %s14, 1
      %s158 = scalar_select %p157, %s14, 1
      %s159 = smul.addr %s158, 8
      %s160 = scalar_lea.vmem %s3, %s159
      %s161 = smul.u32 16, %s14
      %p162 = scmp.lt.s32.totalorder %s161, 31
      %s163 = scalar_select %p162, %s161, 31
      %s164 = smul.addr %s163, 8
      %s165 = scalar_lea.vmem %s0, %s164
      %s166 = smul.u32 16, %s14
      %p167 = scmp.lt.s32.totalorder %s14, 1
      %s168 = scalar_select %p167, %s14, 1
      %s169 = smul.addr %s168, 8
      %s170 = scalar_lea.vmem %s3, %s169
      %172 = vst [vmem:[#allocation2] sm:$0xff] 0.0
      %173 = vst [vmem:[#allocation2 + $0x8] sm:$0xff] 0.0
      %174 = vst [vmem:[#allocation2 + $0x10] sm:$0xff] 0.0
      %175 = vst [vmem:[#allocation2 + $0x18] sm:$0xff] 0.0
      %176 = vst [vmem:[#allocation2 + $0x20] sm:$0xff] 0.0
      %177 = vst [vmem:[#allocation2 + $0x28] sm:$0xff] 0.0
      %178 = vst [vmem:[#allocation2 + $0x30] sm:$0xff] 0.0
      %179 = vst [vmem:[#allocation2 + $0x38] sm:$0xff] 0.0
      %180 = vst [vmem:[#allocation2 + $0x40] sm:$0xff] 0.0
      %181 = vst [vmem:[#allocation2 + $0x48] sm:$0xff] 0.0
      %182 = vst [vmem:[#allocation2 + $0x50] sm:$0xff] 0.0
      %183 = vst [vmem:[#allocation2 + $0x58] sm:$0xff] 0.0
      %184 = vst [vmem:[#allocation2 + $0x60] sm:$0xff] 0.0
      %185 = vst [vmem:[#allocation2 + $0x68] sm:$0xff] 0.0
      %186 = vst [vmem:[#allocation2 + $0x70] sm:$0xff] 0.0
      %187 = vst [vmem:[#allocation2 + $0x78] sm:$0xff] 0.0
      %v188 = vld [vmem:[%s165] sm:$0xff]
      %v189 = vld [vmem:[%s165 + $0x8] sm:$0xff]
      %v190 = vld [vmem:[%s165 + $0x10] sm:$0xff]
      %v191 = vld [vmem:[%s165 + $0x18] sm:$0xff]
      %v192 = vld [vmem:[%s165 + $0x20] sm:$0xff]
      %v193 = vld [vmem:[%s165 + $0x28] sm:$0xff]
      %v194 = vld [vmem:[%s165 + $0x30] sm:$0xff]
      %v195 = vld [vmem:[%s165 + $0x38] sm:$0xff]
      %v196 = vld [vmem:[%s165 + $0x40] sm:$0xff]
      %v197 = vld [vmem:[%s165 + $0x48] sm:$0xff]
      %v198 = vld [vmem:[%s165 + $0x50] sm:$0xff]
      %v199 = vld [vmem:[%s165 + $0x58] sm:$0xff]
      %v200 = vld [vmem:[%s165 + $0x60] sm:$0xff]
      %v201 = vld [vmem:[%s165 + $0x68] sm:$0xff]
      %v202 = vld [vmem:[%s165 + $0x70] sm:$0xff]
      %v203 = vld [vmem:[%s165 + $0x78] sm:$0xff]
      %vm204 = vcmask 343040
      %205 = vst.msk [vmem:[#allocation2] sm:$0xff] %vm204, %v188
      %206 = vst.msk [vmem:[#allocation2 + $0x8] sm:$0xff] %vm204, %v189
      %207 = vst.msk [vmem:[#allocation2 + $0x10] sm:$0xff] %vm204, %v190
      %208 = vst.msk [vmem:[#allocation2 + $0x18] sm:$0xff] %vm204, %v191
      %209 = vst.msk [vmem:[#allocation2 + $0x20] sm:$0xff] %vm204, %v192
      %210 = vst.msk [vmem:[#allocation2 + $0x28] sm:$0xff] %vm204, %v193
      %211 = vst.msk [vmem:[#allocation2 + $0x30] sm:$0xff] %vm204, %v194
      %212 = vst.msk [vmem:[#allocation2 + $0x38] sm:$0xff] %vm204, %v195
      %213 = vst.msk [vmem:[#allocation2 + $0x40] sm:$0xff] %vm204, %v196
      %214 = vst.msk [vmem:[#allocation2 + $0x48] sm:$0xff] %vm204, %v197
      %215 = vst.msk [vmem:[#allocation2 + $0x50] sm:$0xff] %vm204, %v198
      %216 = vst.msk [vmem:[#allocation2 + $0x58] sm:$0xff] %vm204, %v199
      %217 = vst.msk [vmem:[#allocation2 + $0x60] sm:$0xff] %vm204, %v200
      %218 = vst.msk [vmem:[#allocation2 + $0x68] sm:$0xff] %vm204, %v201
      %219 = vst.msk [vmem:[#allocation2 + $0x70] sm:$0xff] %vm204, %v202
      %220 = vst.msk [vmem:[#allocation2 + $0x78] sm:$0xff] %vm204, %v203
      %v221 = vld [vmem:[%s2] sm:$0xff]
      %v222 = vld [vmem:[#allocation2] sm:$0xff]
      %v223 = vld [vmem:[#allocation2 + $0x8] sm:$0xff]
      %v224 = vld [vmem:[#allocation2 + $0x10] sm:$0xff]
      %v225 = vld [vmem:[#allocation2 + $0x18] sm:$0xff]
      %v226 = vld [vmem:[#allocation2 + $0x20] sm:$0xff]
      %v227 = vld [vmem:[#allocation2 + $0x28] sm:$0xff]
      %v228 = vld [vmem:[#allocation2 + $0x30] sm:$0xff]
      %v229 = vld [vmem:[#allocation2 + $0x38] sm:$0xff]
      %v230 = vld [vmem:[#allocation2 + $0x40] sm:$0xff]
      %v231 = vld [vmem:[#allocation2 + $0x48] sm:$0xff]
      %v232 = vld [vmem:[#allocation2 + $0x50] sm:$0xff]
      %v233 = vld [vmem:[#allocation2 + $0x58] sm:$0xff]
      %v234 = vld [vmem:[#allocation2 + $0x60] sm:$0xff]
      %v235 = vld [vmem:[#allocation2 + $0x68] sm:$0xff]
      %v236 = vld [vmem:[#allocation2 + $0x70] sm:$0xff]
      %v237 = vld [vmem:[#allocation2 + $0x78] sm:$0xff]
      %v238 = vpack.c.bf16 %v223, %v222
      %v239 = vpack.c.bf16 %v225, %v224
      %v240 = vpack.c.bf16 %v227, %v226
      %v241 = vpack.c.bf16 %v229, %v228
      %v242 = vpack.c.bf16 %v231, %v230
      %v243 = vpack.c.bf16 %v233, %v232
      %v244 = vpack.c.bf16 %v235, %v234
      %v245 = vpack.c.bf16 %v237, %v236
      %v246 = vld [vmem:[%s1] sm:$0xf]
      %v247 = vld [vmem:[%s1 + $0x4] sm:$0xf]
      %v248 = vld [vmem:[%s1 + $0x8] sm:$0xf]
      %v249 = vld [vmem:[%s1 + $0xc] sm:$0xf]
      %v250 = vld [vmem:[%s1 + $0x10] sm:$0xf]
      %v251 = vld [vmem:[%s1 + $0x14] sm:$0xf]
      %v252 = vld [vmem:[%s1 + $0x18] sm:$0xf]
      %v253 = vld [vmem:[%s1 + $0x1c] sm:$0xf]
      %v254 = vld [vmem:[%s1 + $0x20] sm:$0xf]
      %v255 = vld [vmem:[%s1 + $0x24] sm:$0xf]
      %v256 = vld [vmem:[%s1 + $0x28] sm:$0xf]
      %v257 = vld [vmem:[%s1 + $0x2c] sm:$0xf]
      %v258 = vld [vmem:[%s1 + $0x30] sm:$0xf]
      %v259 = vld [vmem:[%s1 + $0x34] sm:$0xf]
      %v260 = vld [vmem:[%s1 + $0x38] sm:$0xf]
      %v261 = vld [vmem:[%s1 + $0x3c] sm:$0xf]
      %v262 = vlaneseq
      %v263 = vshrl.u32 %v262, 7
      %v264 = vsub.s32 0, %v263
      %v265 = vrot.slane %v221, %v264
      %v282 = vunpack.c.l.b16 %v246
      %v283 = vunpack.c.l.b16 %v247
      %v284 = vunpack.c.l.b16 %v248
      %v285 = vunpack.c.l.b16 %v249
      %v286 = vunpack.c.l.b16 %v250
      %v287 = vunpack.c.l.b16 %v251
      %v288 = vunpack.c.l.b16 %v252
      %v289 = vunpack.c.l.b16 %v253
      %v290 = vunpack.c.l.b16 %v254
      %v291 = vunpack.c.l.b16 %v255
      %v292 = vunpack.c.l.b16 %v256
      %v293 = vunpack.c.l.b16 %v257
      %v294 = vunpack.c.l.b16 %v258
      %v295 = vunpack.c.l.b16 %v259
      %v296 = vunpack.c.l.b16 %v260
      %v297 = vunpack.c.l.b16 %v261
      %v298 = vpack.c.b16 %v283, %v282
      %v299 = vpack.c.b16 %v285, %v284
      %v300 = vpack.c.b16 %v287, %v286
      %v301 = vpack.c.b16 %v289, %v288
      %v302 = vpack.c.b16 %v291, %v290
      %v303 = vpack.c.b16 %v293, %v292
      %v304 = vpack.c.b16 %v295, %v294
      %v305 = vpack.c.b16 %v297, %v296
      %314 = vmatprep.subr.bf16.mxu0 0
      %315 = vmatpush1.bf16.msra.mxu0 %v298
      %316 = vmatprep.subr.bf16.mxu0 0
      %317 = vmatpush1.bf16.msra.mxu0 %v299
      %318 = vmatprep.subr.bf16.mxu0 0
      %319 = vmatpush1.bf16.msra.mxu0 %v300
      %320 = vmatprep.subr.bf16.mxu0 0
      %321 = vmatpush1.bf16.msra.mxu0 %v301
      %322 = vmatprep.subr.bf16.mxu0 0
      %323 = vmatpush1.bf16.msra.mxu0 %v302
      %324 = vmatprep.subr.bf16.mxu0 0
      %325 = vmatpush1.bf16.msra.mxu0 %v303
      %326 = vmatprep.subr.bf16.mxu0 0
      %327 = vmatpush1.bf16.msra.mxu0 %v304
      %328 = vmatprep.subr.bf16.mxu0 0
      %329 = vmatpush1.bf16.msra.mxu0 %v305
      %330 = vmatprep.subr.bf16.mxu0 0
      %331 = vmatpush1.bf16.msra.mxu0 0
      %332 = vmatprep.subr.bf16.mxu0 0
      %333 = vmatpush1.bf16.msra.mxu0 0
      %334 = vmatprep.subr.bf16.mxu0 0
      %335 = vmatpush1.bf16.msra.mxu0 0
      %336 = vmatprep.subr.bf16.mxu0 0
      %337 = vmatpush1.bf16.msra.mxu0 0
      %338 = vmatprep.subr.bf16.mxu0 0
      %339 = vmatpush1.bf16.msra.mxu0 0
      %340 = vmatprep.subr.bf16.mxu0 0
      %341 = vmatpush1.bf16.msra.mxu0 0
      %342 = vmatprep.subr.bf16.mxu0 0
      %343 = vmatpush1.bf16.msra.mxu0 0
      %344 = vmatprep.subr.bf16.mxu0 0
      %345 = vmatpush1.bf16.msra.mxu0 0
      %346 = vmatprep.mubr.bf16.mxu0 0
      %347 = vmatmul.mubr.bf16.gmra.mrb[0].mxu0 %v238
      %v348 = vpop.f32.mrb[0].mxu0
      %v349 = vadd.f32 %v265, %v348
      %v350 = vpop.f32.mrb[0].mxu0
      %v351 = vpop.f32.mrb[0].mxu0
      %v352 = vadd.f32 %v265, %v351
      %v353 = vpop.f32.mrb[0].mxu0
      %354 = vmatprep.mubr.bf16.mxu0 0
      %355 = vmatmul.mubr.bf16.gmra.mrb[0].mxu0 %v239
      %v356 = vpop.f32.mrb[0].mxu0
      %v357 = vadd.f32 %v265, %v356
      %v358 = vpop.f32.mrb[0].mxu0
      %v359 = vpop.f32.mrb[0].mxu0
      %v360 = vadd.f32 %v265, %v359
      %v361 = vpop.f32.mrb[0].mxu0
      %362 = vmatprep.mubr.bf16.mxu0 0
      %363 = vmatmul.mubr.bf16.gmra.mrb[0].mxu0 %v240
      %v364 = vpop.f32.mrb[0].mxu0
      %v365 = vadd.f32 %v265, %v364
      %v366 = vpop.f32.mrb[0].mxu0
      %v367 = vpop.f32.mrb[0].mxu0
      %v368 = vadd.f32 %v265, %v367
      %v369 = vpop.f32.mrb[0].mxu0
      %370 = vmatprep.mubr.bf16.mxu0 0
      %371 = vmatmul.mubr.bf16.gmra.mrb[0].mxu0 %v241
      %v372 = vpop.f32.mrb[0].mxu0
      %v373 = vadd.f32 %v265, %v372
      %v374 = vpop.f32.mrb[0].mxu0
      %v375 = vpop.f32.mrb[0].mxu0
      %v376 = vadd.f32 %v265, %v375
      %v377 = vpop.f32.mrb[0].mxu0
      %378 = vmatprep.mubr.bf16.mxu0 0
      %379 = vmatmul.mubr.bf16.gmra.mrb[0].mxu0 %v242
      %v380 = vpop.f32.mrb[0].mxu0
      %v381 = vadd.f32 %v265, %v380
      %v382 = vpop.f32.mrb[0].mxu0
      %v383 = vpop.f32.mrb[0].mxu0
      %v384 = vadd.f32 %v265, %v383
      %v385 = vpop.f32.mrb[0].mxu0
      %386 = vmatprep.mubr.bf16.mxu0 0
      %387 = vmatmul.mubr.bf16.gmra.mrb[0].mxu0 %v243
      %v388 = vpop.f32.mrb[0].mxu0
      %v389 = vadd.f32 %v265, %v388
      %v390 = vpop.f32.mrb[0].mxu0
      %v391 = vpop.f32.mrb[0].mxu0
      %v392 = vadd.f32 %v265, %v391
      %v393 = vpop.f32.mrb[0].mxu0
      %394 = vmatprep.mubr.bf16.mxu0 0
      %395 = vmatmul.mubr.bf16.gmra.mrb[0].mxu0 %v244
      %v396 = vpop.f32.mrb[0].mxu0
      %v397 = vadd.f32 %v265, %v396
      %v398 = vpop.f32.mrb[0].mxu0
      %v399 = vpop.f32.mrb[0].mxu0
      %v400 = vadd.f32 %v265, %v399
      %v401 = vpop.f32.mrb[0].mxu0
      %402 = vmatprep.mubr.bf16.mxu0 0
      %403 = vmatmul.mubr.bf16.gmra.mrb[0].mxu0 %v245
      %v404 = vpop.f32.mrb[0].mxu0
      %v405 = vadd.f32 %v265, %v404
      %v406 = vpop.f32.mrb[0].mxu0
      %v407 = vpop.f32.mrb[0].mxu0
      %v408 = vadd.f32 %v265, %v407
      %v409 = vpop.f32.mrb[0].mxu0
      %410 = vdwg.mxu0
      %vm411 = vcmp.gt.f32.partialorder %v349, 0.0
      %vm412 = vcmp.gt.f32.partialorder %v352, 0.0
      %vm413 = vcmp.gt.f32.partialorder %v357, 0.0
      %vm414 = vcmp.gt.f32.partialorder %v360, 0.0
      %vm415 = vcmp.gt.f32.partialorder %v365, 0.0
      %vm416 = vcmp.gt.f32.partialorder %v368, 0.0
      %vm417 = vcmp.gt.f32.partialorder %v373, 0.0
      %vm418 = vcmp.gt.f32.partialorder %v376, 0.0
      %vm419 = vcmp.gt.f32.partialorder %v381, 0.0
      %vm420 = vcmp.gt.f32.partialorder %v384, 0.0
      %vm421 = vcmp.gt.f32.partialorder %v389, 0.0
      %vm422 = vcmp.gt.f32.partialorder %v392, 0.0
      %vm423 = vcmp.gt.f32.partialorder %v397, 0.0
      %vm424 = vcmp.gt.f32.partialorder %v400, 0.0
      %vm425 = vcmp.gt.f32.partialorder %v405, 0.0
      %vm426 = vcmp.gt.f32.partialorder %v408, 0.0
      %v427 = vmul.f32 %v349, 0.2
      %v428 = vmul.f32 %v352, 0.2
      %v429 = vmul.f32 %v357, 0.2
      %v430 = vmul.f32 %v360, 0.2
      %v431 = vmul.f32 %v365, 0.2
      %v432 = vmul.f32 %v368, 0.2
      %v433 = vmul.f32 %v373, 0.2
      %v434 = vmul.f32 %v376, 0.2
      %v435 = vmul.f32 %v381, 0.2
      %v436 = vmul.f32 %v384, 0.2
      %v437 = vmul.f32 %v389, 0.2
      %v438 = vmul.f32 %v392, 0.2
      %v439 = vmul.f32 %v397, 0.2
      %v440 = vmul.f32 %v400, 0.2
      %v441 = vmul.f32 %v405, 0.2
      %v442 = vmul.f32 %v408, 0.2
      %v443 = vsel %vm411, %v349, %v427
      %v444 = vsel %vm412, %v352, %v428
      %v445 = vsel %vm413, %v357, %v429
      %v446 = vsel %vm414, %v360, %v430
      %v447 = vsel %vm415, %v365, %v431
      %v448 = vsel %vm416, %v368, %v432
      %v449 = vsel %vm417, %v373, %v433
      %v450 = vsel %vm418, %v376, %v434
      %v451 = vsel %vm419, %v381, %v435
      %v452 = vsel %vm420, %v384, %v436
      %v453 = vsel %vm421, %v389, %v437
      %v454 = vsel %vm422, %v392, %v438
      %v455 = vsel %vm423, %v397, %v439
      %v456 = vsel %vm424, %v400, %v440
      %v457 = vsel %vm425, %v405, %v441
      %v458 = vsel %vm426, %v408, %v442
      %v459 = vpack.c.bf16 %v444, %v443
      %v460 = vpack.c.bf16 %v446, %v445
      %v461 = vpack.c.bf16 %v448, %v447
      %v462 = vpack.c.bf16 %v450, %v449
      %v463 = vpack.c.bf16 %v452, %v451
      %v464 = vpack.c.bf16 %v454, %v453
      %v465 = vpack.c.bf16 %v456, %v455
      %v466 = vpack.c.bf16 %v458, %v457
      %s467 = scalar_lea.vmem %s1, 64
      %v468 = vld [vmem:[%s467] sm:$0xf]
      %v469 = vld [vmem:[%s467 + $0x4] sm:$0xf]
      %v470 = vld [vmem:[%s467 + $0x8] sm:$0xf]
      %v471 = vld [vmem:[%s467 + $0xc] sm:$0xf]
      %v472 = vld [vmem:[%s467 + $0x10] sm:$0xf]
      %v473 = vld [vmem:[%s467 + $0x14] sm:$0xf]
      %v474 = vld [vmem:[%s467 + $0x18] sm:$0xf]
      %v475 = vld [vmem:[%s467 + $0x1c] sm:$0xf]
      %v476 = vld [vmem:[%s467 + $0x20] sm:$0xf]
      %v477 = vld [vmem:[%s467 + $0x24] sm:$0xf]
      %v478 = vld [vmem:[%s467 + $0x28] sm:$0xf]
      %v479 = vld [vmem:[%s467 + $0x2c] sm:$0xf]
      %v480 = vld [vmem:[%s467 + $0x30] sm:$0xf]
      %v481 = vld [vmem:[%s467 + $0x34] sm:$0xf]
      %v482 = vld [vmem:[%s467 + $0x38] sm:$0xf]
      %v483 = vld [vmem:[%s467 + $0x3c] sm:$0xf]
      %v484 = vlaneseq
      %v485 = vshrl.u32 %v484, 7
      %v486 = vsub.s32 1, %v485
      %v487 = vrot.slane %v221, %v486
      %v504 = vunpack.c.l.b16 %v468
      %v505 = vunpack.c.l.b16 %v469
      %v506 = vunpack.c.l.b16 %v470
      %v507 = vunpack.c.l.b16 %v471
      %v508 = vunpack.c.l.b16 %v472
      %v509 = vunpack.c.l.b16 %v473
      %v510 = vunpack.c.l.b16 %v474
      %v511 = vunpack.c.l.b16 %v475
      %v512 = vunpack.c.l.b16 %v476
      %v513 = vunpack.c.l.b16 %v477
      %v514 = vunpack.c.l.b16 %v478
      %v515 = vunpack.c.l.b16 %v479
      %v516 = vunpack.c.l.b16 %v480
      %v517 = vunpack.c.l.b16 %v481
      %v518 = vunpack.c.l.b16 %v482
      %v519 = vunpack.c.l.b16 %v483
      %v520 = vpack.c.b16 %v505, %v504
      %v521 = vpack.c.b16 %v507, %v506
      %v522 = vpack.c.b16 %v509, %v508
      %v523 = vpack.c.b16 %v511, %v510
      %v524 = vpack.c.b16 %v513, %v512
      %v525 = vpack.c.b16 %v515, %v514
      %v526 = vpack.c.b16 %v517, %v516
      %v527 = vpack.c.b16 %v519, %v518
      %536 = vmatprep.subr.bf16.mxu0 0
      %537 = vmatpush1.bf16.msra.mxu0 %v520
      %538 = vmatprep.subr.bf16.mxu0 0
      %539 = vmatpush1.bf16.msra.mxu0 %v521
      %540 = vmatprep.subr.bf16.mxu0 0
      %541 = vmatpush1.bf16.msra.mxu0 %v522
      %542 = vmatprep.subr.bf16.mxu0 0
      %543 = vmatpush1.bf16.msra.mxu0 %v523
      %544 = vmatprep.subr.bf16.mxu0 0
      %545 = vmatpush1.bf16.msra.mxu0 %v524
      %546 = vmatprep.subr.bf16.mxu0 0
      %547 = vmatpush1.bf16.msra.mxu0 %v525
      %548 = vmatprep.subr.bf16.mxu0 0
      %549 = vmatpush1.bf16.msra.mxu0 %v526
      %550 = vmatprep.subr.bf16.mxu0 0
      %551 = vmatpush1.bf16.msra.mxu0 %v527
      %552 = vmatprep.subr.bf16.mxu0 0
      %553 = vmatpush1.bf16.msra.mxu0 0
      %554 = vmatprep.subr.bf16.mxu0 0
      %555 = vmatpush1.bf16.msra.mxu0 0
      %556 = vmatprep.subr.bf16.mxu0 0
      %557 = vmatpush1.bf16.msra.mxu0 0
      %558 = vmatprep.subr.bf16.mxu0 0
      %559 = vmatpush1.bf16.msra.mxu0 0
      %560 = vmatprep.subr.bf16.mxu0 0
      %561 = vmatpush1.bf16.msra.mxu0 0
      %562 = vmatprep.subr.bf16.mxu0 0
      %563 = vmatpush1.bf16.msra.mxu0 0
      %564 = vmatprep.subr.bf16.mxu0 0
      %565 = vmatpush1.bf16.msra.mxu0 0
      %566 = vmatprep.subr.bf16.mxu0 0
      %567 = vmatpush1.bf16.msra.mxu0 0
      %568 = vmatprep.mubr.bf16.mxu0 0
      %569 = vmatmul.mubr.bf16.gmra.mrb[0].mxu0 %v459
      %v570 = vpop.f32.mrb[0].mxu0
      %v571 = vadd.f32 %v487, %v570
      %v572 = vpop.f32.mrb[0].mxu0
      %v573 = vpop.f32.mrb[0].mxu0
      %v574 = vadd.f32 %v487, %v573
      %v575 = vpop.f32.mrb[0].mxu0
      %576 = vmatprep.mubr.bf16.mxu0 0
      %577 = vmatmul.mubr.bf16.gmra.mrb[0].mxu0 %v460
      %v578 = vpop.f32.mrb[0].mxu0
      %v579 = vadd.f32 %v487, %v578
      %v580 = vpop.f32.mrb[0].mxu0
      %v581 = vpop.f32.mrb[0].mxu0
      %v582 = vadd.f32 %v487, %v581
      %v583 = vpop.f32.mrb[0].mxu0
      %584 = vmatprep.mubr.bf16.mxu0 0
      %585 = vmatmul.mubr.bf16.gmra.mrb[0].mxu0 %v461
      %v586 = vpop.f32.mrb[0].mxu0
      %v587 = vadd.f32 %v487, %v586
      %v588 = vpop.f32.mrb[0].mxu0
      %v589 = vpop.f32.mrb[0].mxu0
      %v590 = vadd.f32 %v487, %v589
      %v591 = vpop.f32.mrb[0].mxu0
      %592 = vmatprep.mubr.bf16.mxu0 0
      %593 = vmatmul.mubr.bf16.gmra.mrb[0].mxu0 %v462
      %v594 = vpop.f32.mrb[0].mxu0
      %v595 = vadd.f32 %v487, %v594
      %v596 = vpop.f32.mrb[0].mxu0
      %v597 = vpop.f32.mrb[0].mxu0
      %v598 = vadd.f32 %v487, %v597
      %v599 = vpop.f32.mrb[0].mxu0
      %600 = vmatprep.mubr.bf16.mxu0 0
      %601 = vmatmul.mubr.bf16.gmra.mrb[0].mxu0 %v463
      %v602 = vpop.f32.mrb[0].mxu0
      %v603 = vadd.f32 %v487, %v602
      %v604 = vpop.f32.mrb[0].mxu0
      %v605 = vpop.f32.mrb[0].mxu0
      %v606 = vadd.f32 %v487, %v605
      %v607 = vpop.f32.mrb[0].mxu0
      %608 = vmatprep.mubr.bf16.mxu0 0
      %609 = vmatmul.mubr.bf16.gmra.mrb[0].mxu0 %v464
      %v610 = vpop.f32.mrb[0].mxu0
      %v611 = vadd.f32 %v487, %v610
      %v612 = vpop.f32.mrb[0].mxu0
      %v613 = vpop.f32.mrb[0].mxu0
      %v614 = vadd.f32 %v487, %v613
      %v615 = vpop.f32.mrb[0].mxu0
      %616 = vmatprep.mubr.bf16.mxu0 0
      %617 = vmatmul.mubr.bf16.gmra.mrb[0].mxu0 %v465
      %v618 = vpop.f32.mrb[0].mxu0
      %v619 = vadd.f32 %v487, %v618
      %v620 = vpop.f32.mrb[0].mxu0
      %v621 = vpop.f32.mrb[0].mxu0
      %v622 = vadd.f32 %v487, %v621
      %v623 = vpop.f32.mrb[0].mxu0
      %624 = vmatprep.mubr.bf16.mxu0 0
      %625 = vmatmul.mubr.bf16.gmra.mrb[0].mxu0 %v466
      %v626 = vpop.f32.mrb[0].mxu0
      %v627 = vadd.f32 %v487, %v626
      %v628 = vpop.f32.mrb[0].mxu0
      %v629 = vpop.f32.mrb[0].mxu0
      %v630 = vadd.f32 %v487, %v629
      %v631 = vpop.f32.mrb[0].mxu0
      %632 = vdwg.mxu0
      %vm633 = vcmp.gt.f32.partialorder %v571, 0.0
      %vm634 = vcmp.gt.f32.partialorder %v574, 0.0
      %vm635 = vcmp.gt.f32.partialorder %v579, 0.0
      %vm636 = vcmp.gt.f32.partialorder %v582, 0.0
      %vm637 = vcmp.gt.f32.partialorder %v587, 0.0
      %vm638 = vcmp.gt.f32.partialorder %v590, 0.0
      %vm639 = vcmp.gt.f32.partialorder %v595, 0.0
      %vm640 = vcmp.gt.f32.partialorder %v598, 0.0
      %vm641 = vcmp.gt.f32.partialorder %v603, 0.0
      %vm642 = vcmp.gt.f32.partialorder %v606, 0.0
      %vm643 = vcmp.gt.f32.partialorder %v611, 0.0
      %vm644 = vcmp.gt.f32.partialorder %v614, 0.0
      %vm645 = vcmp.gt.f32.partialorder %v619, 0.0
      %vm646 = vcmp.gt.f32.partialorder %v622, 0.0
      %vm647 = vcmp.gt.f32.partialorder %v627, 0.0
      %vm648 = vcmp.gt.f32.partialorder %v630, 0.0
      %v649 = vmul.f32 %v571, 0.2
      %v650 = vmul.f32 %v574, 0.2
      %v651 = vmul.f32 %v579, 0.2
      %v652 = vmul.f32 %v582, 0.2
      %v653 = vmul.f32 %v587, 0.2
      %v654 = vmul.f32 %v590, 0.2
      %v655 = vmul.f32 %v595, 0.2
      %v656 = vmul.f32 %v598, 0.2
      %v657 = vmul.f32 %v603, 0.2
      %v658 = vmul.f32 %v606, 0.2
      %v659 = vmul.f32 %v611, 0.2
      %v660 = vmul.f32 %v614, 0.2
      %v661 = vmul.f32 %v619, 0.2
      %v662 = vmul.f32 %v622, 0.2
      %v663 = vmul.f32 %v627, 0.2
      %v664 = vmul.f32 %v630, 0.2
      %v665 = vsel %vm633, %v571, %v649
      %v666 = vsel %vm634, %v574, %v650
      %v667 = vsel %vm635, %v579, %v651
      %v668 = vsel %vm636, %v582, %v652
      %v669 = vsel %vm637, %v587, %v653
      %v670 = vsel %vm638, %v590, %v654
      %v671 = vsel %vm639, %v595, %v655
      %v672 = vsel %vm640, %v598, %v656
      %v673 = vsel %vm641, %v603, %v657
      %v674 = vsel %vm642, %v606, %v658
      %v675 = vsel %vm643, %v611, %v659
      %v676 = vsel %vm644, %v614, %v660
      %v677 = vsel %vm645, %v619, %v661
      %v678 = vsel %vm646, %v622, %v662
      %v679 = vsel %vm647, %v627, %v663
      %v680 = vsel %vm648, %v630, %v664
      %681 = vxpose.xlu0.b32.start [1/16] %v665, 128
      %682 = vxpose.xlu0.b32.cont [2/16] %v666, 128
      %683 = vxpose.xlu0.b32.cont [3/16] %v667, 128
      %684 = vxpose.xlu0.b32.cont [4/16] %v668, 128
      %685 = vxpose.xlu0.b32.cont [5/16] %v669, 128
      %686 = vxpose.xlu0.b32.cont [6/16] %v670, 128
      %687 = vxpose.xlu0.b32.cont [7/16] %v671, 128
      %688 = vxpose.xlu0.b32.cont [8/16] %v672, 128
      %689 = vxpose.xlu0.b32.cont [9/16] %v673, 128
      %690 = vxpose.xlu0.b32.cont [10/16] %v674, 128
      %691 = vxpose.xlu0.b32.cont [11/16] %v675, 128
      %692 = vxpose.xlu0.b32.cont [12/16] %v676, 128
      %693 = vxpose.xlu0.b32.cont [13/16] %v677, 128
      %694 = vxpose.xlu0.b32.cont [14/16] %v678, 128
      %695 = vxpose.xlu0.b32.cont [15/16] %v679, 128
      %696 = vxpose.xlu0.b32.end [16/16] %v680, 128
      %v697 = vpop.trf.xlu0
      %v698 = vpop.trf.xlu0
      %v699 = vpop.trf.xlu0
      %v700 = vpop.trf.xlu0
      %v701 = vpop.trf.xlu0
      %v702 = vpop.trf.xlu0
      %v703 = vpop.trf.xlu0
      %v704 = vpop.trf.xlu0
      %v705 = vpop.trf.xlu0
      %v706 = vpop.trf.xlu0
      %v707 = vpop.trf.xlu0
      %v708 = vpop.trf.xlu0
      %v709 = vpop.trf.xlu0
      %v710 = vpop.trf.xlu0
      %v711 = vpop.trf.xlu0
      %v712 = vpop.trf.xlu0
      %v713 = vpack.c.bf16 %v698, %v697
      %v714 = vpack.c.bf16 %v700, %v699
      %v715 = vpack.c.bf16 %v702, %v701
      %v716 = vpack.c.bf16 %v704, %v703
      %v717 = vpack.c.bf16 %v706, %v705
      %v718 = vpack.c.bf16 %v708, %v707
      %v719 = vpack.c.bf16 %v710, %v709
      %v720 = vpack.c.bf16 %v712, %v711
      %s721 = scalar_lea.vmem %s1, 128
      %v722 = vld [vmem:[%s721] sm:$0xf]
      %v723 = vlaneseq
      %v724 = vshrl.u32 %v723, 7
      %v725 = vsub.s32 2, %v724
      %v726 = vrot.slane %v221, %v725
      %727 = vmatprep.subr.bf16.mxu0 0
      %728 = vmatpush1.bf16.msra.mxu0 %v713
      %729 = vmatprep.subr.bf16.mxu0 0
      %730 = vmatpush1.bf16.msra.mxu0 %v714
      %731 = vmatprep.subr.bf16.mxu0 0
      %732 = vmatpush1.bf16.msra.mxu0 %v715
      %733 = vmatprep.subr.bf16.mxu0 0
      %734 = vmatpush1.bf16.msra.mxu0 %v716
      %735 = vmatprep.subr.bf16.mxu0 0
      %736 = vmatpush1.bf16.msra.mxu0 %v717
      %737 = vmatprep.subr.bf16.mxu0 0
      %738 = vmatpush1.bf16.msra.mxu0 %v718
      %739 = vmatprep.subr.bf16.mxu0 0
      %740 = vmatpush1.bf16.msra.mxu0 %v719
      %741 = vmatprep.subr.bf16.mxu0 0
      %742 = vmatpush1.bf16.msra.mxu0 %v720
      %743 = vmatprep.subr.bf16.mxu0 0
      %744 = vmatpush1.bf16.msra.mxu0 0
      %745 = vmatprep.subr.bf16.mxu0 0
      %746 = vmatpush1.bf16.msra.mxu0 0
      %747 = vmatprep.subr.bf16.mxu0 0
      %748 = vmatpush1.bf16.msra.mxu0 0
      %749 = vmatprep.subr.bf16.mxu0 0
      %750 = vmatpush1.bf16.msra.mxu0 0
      %751 = vmatprep.subr.bf16.mxu0 0
      %752 = vmatpush1.bf16.msra.mxu0 0
      %753 = vmatprep.subr.bf16.mxu0 0
      %754 = vmatpush1.bf16.msra.mxu0 0
      %755 = vmatprep.subr.bf16.mxu0 0
      %756 = vmatpush1.bf16.msra.mxu0 0
      %757 = vmatprep.subr.bf16.mxu0 0
      %758 = vmatpush1.bf16.msra.mxu0 0
      %759 = vmatprep.mubr.bf16.mxu0 0
      %760 = vmatmul.mubr.bf16.gmra.mrb[0].mxu0 %v722
      %v761 = vpop.f32.mrb[0].mxu0
      %v762 = vadd.f32 %v726, %v761
      %v763 = vpop.f32.mrb[0].mxu0
      %v764 = vpop.f32.mrb[0].mxu0
      %v765 = vpop.f32.mrb[0].mxu0
      %766 = vdwg.mxu0
      %767 = vst [vmem:[%s170] sm:$0xff] %v762
      %p768 = scmp.lt.s32.totalorder %s14, 1
      %s769 = scalar_select %p768, %s14, 1
      %s770 = smul.addr %s769, 8
      %s771 = scalar_lea.vmem %s3, %s770
      // Predicated region
      $region33: #{discriminator_forward.1} parent=31 // pred_check
        %p772 = pneg %p100
      $region34: #{discriminator_forward.1} parent=31 // pred_check_branch
        %774 = sbr.rel (%p772) target = $region36
      $region35: #{discriminator_forward.1} parent=31 // pred_region
        _
      $region36: #{discriminator_forward.1} parent=31 // pred_fallthru
        _
    $region32: #{discriminator_forward.1} parent=5 // pred_fallthru
      _
    %p775 = scmp.le.s32.totalorder 2, %s9
    // Predicated region
    $region37: #{discriminator_forward.1} parent=5 // pred_check
      %p776 = pneg %p775
    $region38: #{discriminator_forward.1} parent=5 // pred_check_branch
      %778 = sbr.rel (%p776) target = $region40
    $region39: #{discriminator_forward.1} parent=5 // pred_region
      %s779 = ssub.s32 %s9, 2
      // Predicated region
      $region41: #{discriminator_forward.1} parent=39 // pred_check
        %p780 = pneg %p106
      $region42: #{discriminator_forward.1} parent=39 // pred_check_branch
        %782 = sbr.rel (%p780) target = $region44
      $region43: #{discriminator_forward.1} parent=39 // pred_region
        %p783 = scmp.lt.s32.totalorder %s15, 1
        %s784 = scalar_select %p783, %s15, 1
        %s785 = smul.addr %s784, 8
        %s786 = scalar_lea.vmem %s3, %s785
      $region44: #{discriminator_forward.1} parent=39 // pred_fallthru
        _
    $region40: #{discriminator_forward.1} parent=5 // pred_fallthru
      _
  $region6: #{discriminator_forward.1} parent=0 // loop_footer
    %s13 = sadd.s32 1, %s9
  $region7: #{discriminator_forward.1} parent=0 // loop_footer_branch
    %8 = sbr.rel target = $region3
  $region8: #{discriminator_forward.1} parent=0 // loop_exit
    _

</llo_original>
